<compile_context>
chip_gen: v7x
topology: tpu7x:2x2x1
jax: 0.10.0
libtpu: 0.0.40
codegen_flags: <defaults>
</compile_context>

<pallas_src>
import functools

import jax
import jax.numpy as jnp
import numpy as np
from jax import lax
from jax.experimental import pallas as pl
from jax.experimental.pallas import tpu as pltpu


def _greedy_match_kernel(w_ref, cost_ref, seq_ref, pen_ref, tot_ref, *, n_skip):
    """One (batch-tile, v-tile) block of the greedy online matching.

    w_ref   : (tv, tb, U) f32  edge weights to real u-nodes; batch on sublanes,
                               u-nodes on lanes, arriving v-step on the slab dim.
    cost_ref: (tb, 1)     f32  -total matched weight (written at the last v-tile).
    seq_ref : (tb, tv)    i32  selection per arriving v-node (0=skip, 1..U=u-node).
    pen_ref : (tb, U)     f32  scratch: additive penalty (-1e30 once matched),
                               carried across v-tiles of the same batch tile.
    tot_ref : (tb, 1)     f32  scratch: running matched weight.
    """
    tv, tb, U = w_ref.shape
    k = pl.program_id(1)
    nk = pl.num_programs(1)

    @pl.when(k == 0)
    def _():
        pen_ref[...] = jnp.zeros_like(pen_ref)
        tot_ref[...] = jnp.zeros_like(tot_ref)

    NEG = jnp.float32(-1e30)                 # safe: skip (weight 0) is never penalized
    u_iota = lax.broadcasted_iota(jnp.int32, (tb, U), 1)
    v_iota = lax.broadcasted_iota(jnp.int32, (tb, tv), 1)

    def step(j, carry):
        pen, sel, tot = carry
        w = w_ref[j]                                    # (tb, U) contiguous slab
        avail = w + pen                                 # matched u-nodes ~ -1e30
        best = jnp.max(avail, axis=-1, keepdims=True)   # (tb, 1)   XLU reduce
        take = best > 0.0                               # skip (weight 0) wins ties at 0
        # min-index tie-break among real u-nodes; +1 because index 0 is the skip node
        real = jnp.min(jnp.where(avail >= best, u_iota, U),
                       axis=-1, keepdims=True)          # (tb, 1)   XLU reduce
        idx = jnp.where(take, real + 1, 0)
        gain = jnp.where(take, best, 0.0)
        pen = jnp.where((u_iota == real) & take, NEG, pen)
        sel = jnp.where(v_iota == j, idx, sel)          # tv<=~128 -> tiny carry
        return pen, sel, tot + gain

    # Forced skips leave the carries and the zero-initialized selections
    # unchanged, so just start the loop after them.
    if n_skip == 0:
        start = 0
    else:
        start = jnp.maximum(n_skip - k * tv, 0)

    pen, sel, tot = lax.fori_loop(
        start, tv, step,
        (pen_ref[...], jnp.zeros((tb, tv), jnp.int32), tot_ref[...]))

    pen_ref[...] = pen
    tot_ref[...] = tot
    seq_ref[...] = sel                                   # lane-dense writeback

    @pl.when(k == nk - 1)
    def _():
        cost_ref[...] = -tot                             # module returns -state.size


@functools.partial(jax.jit, static_argnames=("threshold", "tb", "tv", "layout"))
def greedy_matching(weights, threshold, *, tb=None, tv=128, layout="bvu"):
    """Online greedy bipartite matching (the `greedy-m` baseline forward pass).

    weights : (B, V, U) f32 edge weights from each arriving v-node to the U real
              u-nodes (layout="bvu"), or (V, B, U) if the producer already emits
              the kernel-native layout (layout="vbu", avoids an HBM transpose).
              The implicit skip node has weight 0.
    Returns (-matched_weight (B,) f32, sequences (B, V) i32, 0 = skip).
    """
    weights = jnp.asarray(weights, jnp.float32)
    if layout == "bvu":
        B, V, U = weights.shape
    elif layout == "vbu":
        V, B, U = weights.shape
    else:
        raise ValueError(f"unknown layout {layout!r}")
    n_skip = int(threshold * V)

    lanes = pl.cdiv(U, 128) * 128

    # Batch tile: as wide as possible, but keep >=2 batch grid steps when B
    # allows (v7x megacore shards the "parallel" axis) and keep the weights
    # block bounded in VMEM.
    if tb is None:
        tb = 32
        while tb > 8 and pl.cdiv(B, tb) < 2:
            tb //= 2
    tb = max(8, min(int(tb), 32))
    tb = pl.cdiv(tb, 8) * 8
    # V tile: multiple of 128 so the seq writeback is lane-dense and the
    # in-register selection carry stays tiny.
    if V <= 128:
        tv_ = V
    else:
        tv_ = max(128, (int(tv) // 128) * 128)
    # Keep double-buffered weights blocks small (v7x has only 64 MiB VMEM).
    while tb > 8 and 2 * tv_ * tb * lanes * 4 > (12 << 20):
        tb //= 2

    B_pad = pl.cdiv(B, tb) * tb
    V_pad = pl.cdiv(V, tv_) * tv_

    # Zero padding is semantically inert: all-zero rows/batches greedily pick
    # the skip node and contribute 0 weight.
    if layout == "bvu":
        if (B_pad, V_pad) != (B, V):
            weights = jnp.pad(weights, ((0, B_pad - B), (0, V_pad - V), (0, 0)))
        # TODO(synk): producers should emit (V, B, U) directly (layout="vbu") to
        # skip this extra HBM pass; inside this jit the pad+transpose fuse into
        # a single copy.
        w_t = jnp.transpose(weights, (1, 0, 2))           # (V_pad, B_pad, U)
    else:
        w_t = weights
        if (B_pad, V_pad) != (B, V):
            w_t = jnp.pad(w_t, ((0, V_pad - V), (0, B_pad - B), (0, 0)))

    nb = B_pad // tb
    nk = V_pad // tv_

    # VMEM budget clamped to the chip's real capacity (v7x = 64 MiB).
    try:
        cap = int(pltpu.get_tpu_info().vmem_capacity_bytes)
    except Exception:  # pragma: no cover - conservative fallback
        cap = 64 << 20
    seq_lanes = pl.cdiv(tv_, 128) * 128
    need = (2 * tv_ * tb * lanes * 4          # double-buffered weight blocks
            + 2 * tb * seq_lanes * 4          # double-buffered seq out blocks
            + tb * lanes * 4 + 3 * tb * 128 * 4)  # scratch + cost
    vmem_limit = int(min(cap - (8 << 20), max(32 << 20, 2 * need)))

    kernel = functools.partial(_greedy_match_kernel, n_skip=n_skip)
    cost, seq = pl.pallas_call(
        kernel,
        out_shape=(
            jax.ShapeDtypeStruct((B_pad, 1), jnp.float32),
            jax.ShapeDtypeStruct((B_pad, V_pad), jnp.int32),
        ),
        grid=(nb, nk),
        in_specs=[pl.BlockSpec((tv_, tb, U), lambda b, k: (k, b, 0))],
        out_specs=(
            pl.BlockSpec((tb, 1), lambda b, k: (b, 0)),      # resident across k
            pl.BlockSpec((tb, tv_), lambda b, k: (b, k)),
        ),
        scratch_shapes=[
            pltpu.VMEM((tb, U), jnp.float32),   # availability penalty
            pltpu.VMEM((tb, 1), jnp.float32),   # running matched weight
        ],
        compiler_params=pltpu.CompilerParams(
            dimension_semantics=("parallel", "arbitrary"),
            vmem_limit_bytes=vmem_limit,
        ),
    )(w_t)
    return cost[:B, 0], seq[:B, :V]


def greedy_matching_ref(edge_weights, threshold):
    """Pure-JAX reference (original formulation with an explicit skip column)."""
    edge_weights = jnp.asarray(edge_weights, jnp.float32)
    B, V, U = edge_weights.shape
    U1 = U + 1
    w_full = jnp.concatenate(
        [jnp.zeros((B, V, 1), jnp.float32), edge_weights], axis=-1)
    n_skip = int(threshold * V)

    def one(w):
        def step(carry, j):
            matched, total = carry
            avail = jnp.where(matched > 0.0, -jnp.inf, w[j])
            best = jnp.max(avail)
            idx = jnp.min(jnp.where(avail >= best,
                                    jnp.arange(U1, dtype=jnp.int32), U1))
            sel = jnp.where(j < n_skip, 0, idx).astype(jnp.int32)
            gain = jnp.where((sel > 0) & (j >= n_skip), best, 0.0)
            matched = jnp.where((jnp.arange(U1) == sel) & (sel > 0), 1.0, matched)
            return (matched, total + gain), sel

        (_, total), sels = lax.scan(
            step, (jnp.zeros(U1, jnp.float32), jnp.float32(0.0)),
            jnp.arange(V, dtype=jnp.int32))
        return -total, sels

    return jax.vmap(one)(w_full)


if __name__ == "__main__":
    # Small deterministic problem: batch=12 (exercises batch padding and a
    # 2-step "parallel" batch grid axis), u_size=8, v_size=8, threshold=0.25
    # (n_skip=2).  Weights exclude the skip column (skip weight is implicit 0).
    B, U, V = 12, 8, 8
    threshold = 0.25
    key = jax.random.PRNGKey(0)
    weights = jax.random.uniform(key, (B, V, U), dtype=jnp.float32,
                                 minval=-0.2, maxval=1.0)

    cost, seq = greedy_matching(weights, threshold)
    cost = jax.block_until_ready(cost)
    seq = jax.block_until_ready(seq)

    cost_ref, seq_ref = greedy_matching_ref(weights, threshold)
    assert np.allclose(np.asarray(cost), np.asarray(cost_ref), atol=1e-5), "cost mismatch"
    assert np.array_equal(np.asarray(seq), np.asarray(seq_ref)), "sequence mismatch"

    # Also exercise the multi-v-tile (V > 128, scratch carried across v blocks)
    # path and the producer-native (V, B, U) layout (no wrapper transpose).
    B2, U2, V2 = 24, 16, 160
    w2 = jax.random.uniform(jax.random.PRNGKey(1), (B2, V2, U2), dtype=jnp.float32,
                            minval=-0.3, maxval=1.0)
    cost2, seq2 = greedy_matching(jnp.transpose(w2, (1, 0, 2)), 0.1, layout="vbu")
    cost2 = jax.block_until_ready(cost2)
    seq2 = jax.block_until_ready(seq2)
    cost2_ref, seq2_ref = greedy_matching_ref(w2, 0.1)
    assert np.allclose(np.asarray(cost2), np.asarray(cost2_ref), atol=1e-4), "cost2 mismatch"
    assert np.array_equal(np.asarray(seq2), np.asarray(seq2_ref)), "sequence2 mismatch"

    print("KERNEL_OK")
</pallas_src>

<mosaic_0001>
module attributes {stable_mosaic.version = 11 : i64} {
  func.func @_greedy_match_kernel(%arg0: i32, %arg1: i32, %arg2: memref<8x8x8xf32, #tpu.memory_space<vmem>>, %arg3: memref<8x1xf32, #tpu.memory_space<vmem>>, %arg4: memref<8x8xi32, #tpu.memory_space<vmem>>, %arg5: memref<8x8xf32, #tpu.memory_space<vmem>>, %arg6: memref<8x1xf32, #tpu.memory_space<vmem>>) attributes {dimension_semantics = [#tpu.dimension_semantics<parallel>, #tpu.dimension_semantics<arbitrary>], iteration_bounds = array<i64: 2, 1>, scalar_prefetch = 0 : i64, scratch_operands = 2 : i64, tpu.core_type = #tpu.core_type<tc>, window_params = [{transform_indices = @transform_0, window_bounds = array<i64: 8, 8, 8>}, {transform_indices = @transform_1, window_bounds = array<i64: 8, 1>}, {transform_indices = @transform_2, window_bounds = array<i64: 8, 8>}]} {
    %c0_i32 = arith.constant 0 : i32
    %0 = arith.cmpi eq, %arg1, %c0_i32 : i32
    %1 = arith.extui %0 : i1 to i32
    %c0_i32_0 = arith.constant 0 : i32
    %2 = arith.cmpi ne, %1, %c0_i32_0 : i32
    scf.if %2 {
      %cst_15 = arith.constant 0.000000e+00 : f32
      %20 = vector.broadcast %cst_15 : f32 to vector<8x8xf32>
      %c0_16 = arith.constant 0 : index
      %c0_17 = arith.constant 0 : index
      %21 = vector.load %arg5[%c0_16, %c0_17] : memref<8x8xf32, #tpu.memory_space<vmem>>, vector<8x8xf32>
      tpu.vector_store %arg5[%c0_16, %c0_17], %20 {strides = array<i32>} : memref<8x8xf32, #tpu.memory_space<vmem>>, vector<8x8xf32>,
      %cst_18 = arith.constant 0.000000e+00 : f32
      %22 = vector.broadcast %cst_18 : f32 to vector<8x1xf32>
      %c0_19 = arith.constant 0 : index
      %c0_20 = arith.constant 0 : index
      %23 = vector.load %arg6[%c0_19, %c0_20] : memref<8x1xf32, #tpu.memory_space<vmem>>, vector<8x1xf32>
      tpu.vector_store %arg6[%c0_19, %c0_20], %22 {strides = array<i32>} : memref<8x1xf32, #tpu.memory_space<vmem>>, vector<8x1xf32>,
    } else {
    }
    %3 = tpu.iota {dimensions = array<i32: 1>} : vector<8x8xi32>
    %4 = tpu.iota {dimensions = array<i32: 1>} : vector<8x8xi32>
    %c8_i32 = arith.constant 8 : i32
    %5 = arith.muli %arg1, %c8_i32 : i32
    %c2_i32 = arith.constant 2 : i32
    %6 = arith.subi %c2_i32, %5 : i32
    %c0_i32_1 = arith.constant 0 : i32
    %7 = arith.maxsi %6, %c0_i32_1 : i32
    %c0 = arith.constant 0 : index
    %c0_2 = arith.constant 0 : index
    %8 = vector.load %arg5[%c0, %c0_2] : memref<8x8xf32, #tpu.memory_space<vmem>>, vector<8x8xf32>
    %c0_i32_3 = arith.constant 0 : i32
    %9 = vector.broadcast %c0_i32_3 : i32 to vector<8x8xi32>
    %c0_4 = arith.constant 0 : index
    %c0_5 = arith.constant 0 : index
    %10 = vector.load %arg6[%c0_4, %c0_5] : memref<8x1xf32, #tpu.memory_space<vmem>>, vector<8x1xf32>
    %cst = arith.constant -1.000000e+30 : f32
    %c8_i32_6 = arith.constant 8 : i32
    %11 = arith.subi %c8_i32_6, %7 : i32
    %12 = arith.addi %7, %11 : i32
    %c1_i32 = arith.constant 1 : i32
    %13:3 = scf.for %arg7 = %7 to %12 step %c1_i32 iter_args(%arg8 = %8, %arg9 = %9, %arg10 = %10) -> (vector<8x8xf32>, vector<8x8xi32>, vector<8x1xf32>)  : i32 {
      %20 = arith.index_cast %arg7 : i32 to index
      %c0_15 = arith.constant 0 : index
      %c0_16 = arith.constant 0 : index
      %21 = vector.load %arg2[%20, %c0_15, %c0_16] : memref<8x8x8xf32, #tpu.memory_space<vmem>>, vector<1x8x8xf32>
      %22 = vector.shape_cast %21 : vector<1x8x8xf32> to vector<8x8xf32>
      %23 = arith.addf %22, %arg8 : vector<8x8xf32>
      %cst_17 = arith.constant dense<0xFF800000> : vector<8xf32>
      %24 = vector.multi_reduction <maximumf>, %23, %cst_17 [1] : vector<8x8xf32> to vector<8xf32>
      %25 = vector.shape_cast %24 : vector<8xf32> to vector<8x1xf32>
      %cst_18 = arith.constant 0.000000e+00 : f32
      %26 = vector.broadcast %cst_18 : f32 to vector<8x1xf32>
      %27 = arith.cmpf ogt, %25, %26 : vector<8x1xf32>
      %28 = vector.broadcast %25 : vector<8x1xf32> to vector<8x8xf32>
      %29 = arith.cmpf oge, %23, %28 : vector<8x8xf32>
      %c8_i32_19 = arith.constant 8 : i32
      %30 = vector.broadcast %c8_i32_19 : i32 to vector<8x8xi32>
      %31 = arith.select %29, %3, %30 : vector<8x8xi1>, vector<8x8xi32>
      %cst_20 = arith.constant dense<2147483647> : vector<8xi32>
      %32 = vector.multi_reduction <minsi>, %31, %cst_20 [1] : vector<8x8xi32> to vector<8xi32>
      %33 = vector.shape_cast %32 : vector<8xi32> to vector<8x1xi32>
      %c1_i32_21 = arith.constant 1 : i32
      %34 = vector.broadcast %c1_i32_21 : i32 to vector<8x1xi32>
      %35 = arith.addi %33, %34 : vector<8x1xi32>
      %c0_i32_22 = arith.constant 0 : i32
      %36 = vector.broadcast %c0_i32_22 : i32 to vector<8x1xi32>
      %37 = arith.select %27, %35, %36 : vector<8x1xi1>, vector<8x1xi32>
      %cst_23 = arith.constant 0.000000e+00 : f32
      %38 = vector.broadcast %cst_23 : f32 to vector<8x1xf32>
      %39 = arith.select %27, %25, %38 : vector<8x1xi1>, vector<8x1xf32>
      %40 = vector.broadcast %33 : vector<8x1xi32> to vector<8x8xi32>
      %41 = arith.cmpi eq, %3, %40 : vector<8x8xi32>
      %42 = vector.broadcast %27 : vector<8x1xi1> to vector<8x8xi1>
      %43 = arith.andi %41, %42 : vector<8x8xi1>
      %44 = vector.broadcast %cst : f32 to vector<8x8xf32>
      %45 = arith.select %43, %44, %arg8 : vector<8x8xi1>, vector<8x8xf32>
      %46 = vector.broadcast %arg7 : i32 to vector<8x8xi32>
      %47 = arith.cmpi eq, %4, %46 : vector<8x8xi32>
      %48 = vector.shape_cast %37 : vector<8x1xi32> to vector<8x1xi32>
      %49 = vector.broadcast %48 : vector<8x1xi32> to vector<8x8xi32>
      %50 = arith.select %47, %49, %arg9 : vector<8x8xi1>, vector<8x8xi32>
      %51 = arith.addf %arg10, %39 : vector<8x1xf32>
      scf.yield %45, %50, %51 : vector<8x8xf32>, vector<8x8xi32>, vector<8x1xf32>
    }
    %c0_7 = arith.constant 0 : index
    %c0_8 = arith.constant 0 : index
    %14 = vector.load %arg5[%c0_7, %c0_8] : memref<8x8xf32, #tpu.memory_space<vmem>>, vector<8x8xf32>
    tpu.vector_store %arg5[%c0_7, %c0_8], %13#0 {strides = array<i32>} : memref<8x8xf32, #tpu.memory_space<vmem>>, vector<8x8xf32>,
    %c0_9 = arith.constant 0 : index
    %c0_10 = arith.constant 0 : index
    %15 = vector.load %arg6[%c0_9, %c0_10] : memref<8x1xf32, #tpu.memory_space<vmem>>, vector<8x1xf32>
    tpu.vector_store %arg6[%c0_9, %c0_10], %13#2 {strides = array<i32>} : memref<8x1xf32, #tpu.memory_space<vmem>>, vector<8x1xf32>,
    %c0_11 = arith.constant 0 : index
    %c0_12 = arith.constant 0 : index
    %16 = vector.load %arg4[%c0_11, %c0_12] : memref<8x8xi32, #tpu.memory_space<vmem>>, vector<8x8xi32>
    tpu.vector_store %arg4[%c0_11, %c0_12], %13#1 {strides = array<i32>} : memref<8x8xi32, #tpu.memory_space<vmem>>, vector<8x8xi32>,
    %c0_i32_13 = arith.constant 0 : i32
    %17 = arith.cmpi eq, %arg1, %c0_i32_13 : i32
    %18 = arith.extui %17 : i1 to i32
    %c0_i32_14 = arith.constant 0 : i32
    %19 = arith.cmpi ne, %18, %c0_i32_14 : i32
    scf.if %19 {
      %cst_15 = arith.constant 0.000000e+00 : f32
      %20 = vector.broadcast %cst_15 : f32 to vector<8x1xf32>
      %21 = arith.subf %20, %13#2 : vector<8x1xf32>
      %c0_16 = arith.constant 0 : index
      %c0_17 = arith.constant 0 : index
      %22 = vector.load %arg3[%c0_16, %c0_17] : memref<8x1xf32, #tpu.memory_space<vmem>>, vector<8x1xf32>
      tpu.vector_store %arg3[%c0_16, %c0_17], %21 {strides = array<i32>} : memref<8x1xf32, #tpu.memory_space<vmem>>, vector<8x1xf32>,
    } else {
    }
    return
  }
  func.func @transform_0(%arg0: i32, %arg1: i32) -> (i32, i32, i32) {
    %c0_i32 = arith.constant 0 : i32
    %c0_i32_0 = arith.constant 0 : i32
    return %arg1, %arg0, %c0_i32 : i32, i32, i32
  }
  func.func @transform_1(%arg0: i32, %arg1: i32) -> (i32, i32) {
    %c0_i32 = arith.constant 0 : i32
    %c0_i32_0 = arith.constant 0 : i32
    return %arg0, %c0_i32 : i32, i32
  }
  func.func @transform_2(%arg0: i32, %arg1: i32) -> (i32, i32) {
    %c0_i32 = arith.constant 0 : i32
    return %arg0, %arg1 : i32, i32
  }
}

</mosaic_0001>

<llo_original>
// kernel: greedy_matching.1
$region0: #{greedy_matching.1}
  #allocation0 [shape = 'u32[]', space=smem, size = 0x4, offset = 0x4, fixed_abs, tag = 'smem constant byte address 0x4 - core index']
  #allocation1 [shape = 'u32[144,128]{1,0:T(1,128)}', space=vmem, size = 0x12000, scoped, tag = 'internal scratch']
  #allocation2 [shape = 'f32[8,8]{1,0:T(8,128)}', space=vmem, size = 0x1000, scoped, tag = 'scratch operand']
  #allocation3 [shape = 'f32[8,1]{1,0:T(8,128)}', space=vmem, size = 0x1000, scoped, tag = 'scratch operand']
  %s0 = inlined_call_operand.vmem [shape: f32[8,16,8], index: 0, kind: input, shape index: {}]
  %s1 = inlined_call_operand.vmem [shape: f32[16,1], index: 1, kind: output, shape index: {0}]
  %s2 = inlined_call_operand.vmem [shape: s32[16,8], index: 2, kind: output, shape index: {1}]
  %3 = xla_tuple %s1, %s2
  %s4 = sld [smem:[#allocation0]]
  $region98: #{greedy_matching.1} parent=0
    _
  %s6 = ssub.s32 1, %s4
  %s7 = scalar_select 0, %s6, %s4
  $region1: #{greedy_matching.1} parent=0
    #allocation4 [shape = 'u8[65536]{0}', space=vmem, size = 0x10000, scoped, tag = 'input window, operand 0']
    loop: start=0, step=1, limit=4
    $region2: #{greedy_matching.1} parent=1 // loop_pre_header
      _
    $region3: #{greedy_matching.1} parent=1 // loop_header
      %s9 = sphi 0, %s13
      %p10 = scmp.ge.s32.totalorder %s9, 4
      %s16 = sphi 0, %s28
      %s17 = sphi 0, %s24
      %s18 = sphi 0, %s16
      %s19 = sphi 0, %s17
      %s20 = sphi 0, %s18
      %s21 = sphi 0, %s19
      %s33 = sphi 0, %s35
      %s36 = sphi 0, %s33
      %s37 = sphi 0, %s36
      %s53 = sphi 0, %s37
      %s59 = sphi 0, %s61
      %s62 = sphi 0, %s59
      %s63 = sphi 0, %s62
      %s79 = sphi 0, %s63
      %s87 = sphi 0, %s89
      %s90 = sphi 0, %s87
      %s91 = sphi 0, %s90
      %s107 = sphi 0, %s91
    $region4: #{greedy_matching.1} parent=1 // loop_header_branch
      %12 = sbr.rel (%p10) target = $region8
    $region5: #{greedy_matching.1} parent=1 // loop_body
      %s14 = ssub.s32 %s9, 1
      %s15 = ssub.s32 %s9, 2
      %s22 = sadd.s32 1, %s17
      %p23 = scmp.ge.s32.totalorder %s22, 1
      %s24 = scalar_select %p23, 0, %s22
      %s25 = sadd.s32 1, %s16
      %s26 = scalar_select %p23, %s25, %s16
      %p27 = scmp.ge.s32.totalorder %s26, 2
      %s28 = scalar_select %p27, 0, %s26
      %s29 = ssub.s32 %s17, %s24
      %s30 = ssub.s32 %s16, %s28
      %s31 = sor.u32 %s29, %s30
      %p32 = scmp.eq.s32.totalorder %s31, 0
      %s34 = sadd.s32 %s33, 1
      %s35 = scalar_select %p32, %s33, %s34
      %p38 = pneg %p32
      %p39 = scmp.eq.s32.totalorder %s9, 1
      %p40 = por %p38, %p39
      %p41 = scmp.ne.s32.totalorder %s33, %s36
      %p42 = scmp.eq.s32.totalorder %s9, 0
      %p43 = por %p41, %p42
      %p44 = scmp.ne.s32.totalorder %s33, %s36
      %p45 = scmp.eq.s32.totalorder %s14, 1
      %p46 = por %p44, %p45
      %p47 = scmp.ne.s32.totalorder %s36, %s37
      %p48 = scmp.eq.s32.totalorder %s14, 0
      %p49 = por %p47, %p48
      %p50 = scmp.ne.s32.totalorder %s36, %s37
      %p51 = scmp.eq.s32.totalorder %s15, 1
      %p52 = por %p50, %p51
      %p54 = scmp.ne.s32.totalorder %s37, %s53
      %p55 = scmp.eq.s32.totalorder %s15, 0
      %p56 = por %p54, %p55
      %s57 = ssub.s32 %s16, %s28
      %p58 = scmp.eq.s32.totalorder %s57, 0
      %s60 = sadd.s32 %s59, 1
      %s61 = scalar_select %p58, %s59, %s60
      %p64 = pneg %p58
      %p65 = scmp.eq.s32.totalorder %s9, 1
      %p66 = por %p64, %p65
      %p67 = scmp.ne.s32.totalorder %s59, %s62
      %p68 = scmp.eq.s32.totalorder %s9, 0
      %p69 = por %p67, %p68
      %p70 = scmp.ne.s32.totalorder %s59, %s62
      %p71 = scmp.eq.s32.totalorder %s14, 1
      %p72 = por %p70, %p71
      %p73 = scmp.ne.s32.totalorder %s62, %s63
      %p74 = scmp.eq.s32.totalorder %s14, 0
      %p75 = por %p73, %p74
      %p76 = scmp.ne.s32.totalorder %s62, %s63
      %p77 = scmp.eq.s32.totalorder %s15, 1
      %p78 = por %p76, %p77
      %p80 = scmp.ne.s32.totalorder %s63, %s79
      %p81 = scmp.eq.s32.totalorder %s15, 0
      %p82 = por %p80, %p81
      %s83 = ssub.s32 %s16, %s28
      %s84 = ssub.s32 %s17, %s24
      %s85 = sor.u32 %s83, %s84
      %p86 = scmp.eq.s32.totalorder %s85, 0
      %s88 = sadd.s32 %s87, 1
      %s89 = scalar_select %p86, %s87, %s88
      %p92 = pneg %p86
      %p93 = scmp.eq.s32.totalorder %s9, 1
      %p94 = por %p92, %p93
      %p95 = scmp.ne.s32.totalorder %s87, %s90
      %p96 = scmp.eq.s32.totalorder %s9, 0
      %p97 = por %p95, %p96
      %p98 = scmp.ne.s32.totalorder %s87, %s90
      %p99 = scmp.eq.s32.totalorder %s14, 1
      %p100 = por %p98, %p99
      %p101 = scmp.ne.s32.totalorder %s90, %s91
      %p102 = scmp.eq.s32.totalorder %s14, 0
      %p103 = por %p101, %p102
      %p104 = scmp.ne.s32.totalorder %s90, %s91
      %p105 = scmp.eq.s32.totalorder %s15, 1
      %p106 = por %p104, %p105
      %p108 = scmp.ne.s32.totalorder %s91, %s107
      %p109 = scmp.eq.s32.totalorder %s15, 0
      %p110 = por %p108, %p109
      %p111 = scmp.le.s32.totalorder 1, %s9
      %p112 = scmp.lt.s32.totalorder %s9, 3
      %p113 = pnand %p111, %p112
      %p114 = pneg %p113
      // Predicated region
      $region9: #{greedy_matching.1} parent=5 // pred_check
        _
      $region10: #{greedy_matching.1} parent=5 // pred_check_branch
        %116 = sbr.rel (%p113) target = $region12
      $region11: #{greedy_matching.1} parent=5 // pred_region
        %s117 = ssub.s32 %s9, 1
      $region12: #{greedy_matching.1} parent=5 // pred_fallthru
        _
      %p118 = scmp.lt.s32.totalorder %s9, 2
      // Predicated region
      $region13: #{greedy_matching.1} parent=5 // pred_check
        %p119 = pneg %p118
      $region14: #{greedy_matching.1} parent=5 // pred_check_branch
        %121 = sbr.rel (%p119) target = $region16
      $region15: #{greedy_matching.1} parent=5 // pred_region
        // Predicated region
        $region17: #{greedy_matching.1} parent=15 // pred_check
          %p122 = pneg %p43
        $region18: #{greedy_matching.1} parent=15 // pred_check_branch
          %124 = sbr.rel (%p122) target = $region20
        $region19: #{greedy_matching.1} parent=15 // pred_region
          %s125 = sand.u32 %s33, 1
          %s126 = sand.u32 %s33, 1
          %s127 = smul.addr %s126, 64
          %s128 = scalar_lea.vmem [#allocation4], %s127
          %s129 = smul.u32 8, %s17
          %s130 = smul.addr %s129, 2
          %s131 = sadd.s32 %s16, %s130
          %s132 = smul.addr %s131, 8
          %s133 = scalar_lea.vmem %s0, %s132
          // Predicated region
          $region21: #{greedy_matching.1} parent=19 // pred_check
            _
          $region22: #{greedy_matching.1} parent=19 // pred_check_branch
            %135 = sbr.rel (0) target = $region24
          $region23: #{greedy_matching.1} parent=19 // pred_region
            // Predicated region
            $region25: #{greedy_matching.1} parent=23 // pred_check
              _
            $region26: #{greedy_matching.1} parent=23 // pred_check_branch
              %137 = sbr.rel (0) target = $region28
            $region27: #{greedy_matching.1} parent=23 // pred_region
              // Predicated region
              $region40: #{greedy_matching.1} parent=27 // pred_check
                _
              $region41: #{greedy_matching.1} parent=27 // pred_check_branch
                %166 = sbr.rel (0) target = $region43
              $region42: #{greedy_matching.1} parent=27 // pred_region
                loop: start=0, step=1, limit=1
                $region44: #{greedy_matching.1} parent=42 // loop_pre_header
                  _
                $region45: #{greedy_matching.1} parent=42 // loop_header
                  %s168 = sphi 0, %s172
                  %p169 = scmp.ge.s32.totalorder %s168, 1
                  %s173 = sphi %s133, %s133
                  %s174 = sphi %s128, %s128
                $region46: #{greedy_matching.1} parent=42 // loop_header_branch
                  %171 = sbr.rel (%p169) target = $region50
                $region47: #{greedy_matching.1} parent=42 // loop_body
                  %v175 = vld [vmem:[%s173] sm:$0xff]
                  %176 = vst [vmem:[%s174] sm:$0xff] %v175
                  %v177 = vld [vmem:[%s173 + $0x10] sm:$0xff]
                  %178 = vst [vmem:[%s174 + $0x8] sm:$0xff] %v177
                  %v179 = vld [vmem:[%s173 + $0x20] sm:$0xff]
                  %180 = vst [vmem:[%s174 + $0x10] sm:$0xff] %v179
                  %v181 = vld [vmem:[%s173 + $0x30] sm:$0xff]
                  %182 = vst [vmem:[%s174 + $0x18] sm:$0xff] %v181
                  %v183 = vld [vmem:[%s173 + $0x40] sm:$0xff]
                  %184 = vst [vmem:[%s174 + $0x20] sm:$0xff] %v183
                  %v185 = vld [vmem:[%s173 + $0x50] sm:$0xff]
                  %186 = vst [vmem:[%s174 + $0x28] sm:$0xff] %v185
                  %v187 = vld [vmem:[%s173 + $0x60] sm:$0xff]
                  %188 = vst [vmem:[%s174 + $0x30] sm:$0xff] %v187
                  %v189 = vld [vmem:[%s173 + $0x70] sm:$0xff]
                  %190 = vst [vmem:[%s174 + $0x38] sm:$0xff] %v189
                $region48: #{greedy_matching.1} parent=42 // loop_footer
                  %s172 = sadd.s32 1, %s168
                $region49: #{greedy_matching.1} parent=42 // loop_footer_branch
                  %167 = sbr.rel target = $region45
                $region50: #{greedy_matching.1} parent=42 // loop_exit
                  _
              $region43: #{greedy_matching.1} parent=27 // pred_fallthru
                _
              // Predicated region
              $region51: #{greedy_matching.1} parent=27 // pred_check
                _
              $region52: #{greedy_matching.1} parent=27 // pred_check_branch
                %192 = sbr.rel target = $region54
              $region53: #{greedy_matching.1} parent=27 // pred_region
                _
              $region54: #{greedy_matching.1} parent=27 // pred_fallthru
                _
            $region28: #{greedy_matching.1} parent=23 // pred_fallthru
              _
            // Predicated region
            $region29: #{greedy_matching.1} parent=23 // pred_check
              _
            $region30: #{greedy_matching.1} parent=23 // pred_check_branch
              %139 = sbr.rel target = $region32
            $region31: #{greedy_matching.1} parent=23 // pred_region
              loop: start=0, step=1, limit=1
              $region33: #{greedy_matching.1} parent=31 // loop_pre_header
                _
              $region34: #{greedy_matching.1} parent=31 // loop_header
                %s142 = sphi 0, %s146
                %p143 = scmp.ge.s32.totalorder %s142, 1
                %s147 = sphi %s133, %s133
                %s148 = sphi %s128, %s128
              $region35: #{greedy_matching.1} parent=31 // loop_header_branch
                %145 = sbr.rel (%p143) target = $region39
              $region36: #{greedy_matching.1} parent=31 // loop_body
                %v149 = vld [vmem:[%s147] sm:$0xff]
                %150 = vst [vmem:[%s148] sm:$0xff] %v149
                %v151 = vld [vmem:[%s147 + $0x10] sm:$0xff]
                %152 = vst [vmem:[%s148 + $0x8] sm:$0xff] %v151
                %v153 = vld [vmem:[%s147 + $0x20] sm:$0xff]
                %154 = vst [vmem:[%s148 + $0x10] sm:$0xff] %v153
                %v155 = vld [vmem:[%s147 + $0x30] sm:$0xff]
                %156 = vst [vmem:[%s148 + $0x18] sm:$0xff] %v155
                %v157 = vld [vmem:[%s147 + $0x40] sm:$0xff]
                %158 = vst [vmem:[%s148 + $0x20] sm:$0xff] %v157
                %v159 = vld [vmem:[%s147 + $0x50] sm:$0xff]
                %160 = vst [vmem:[%s148 + $0x28] sm:$0xff] %v159
                %v161 = vld [vmem:[%s147 + $0x60] sm:$0xff]
                %162 = vst [vmem:[%s148 + $0x30] sm:$0xff] %v161
                %v163 = vld [vmem:[%s147 + $0x70] sm:$0xff]
                %164 = vst [vmem:[%s148 + $0x38] sm:$0xff] %v163
              $region37: #{greedy_matching.1} parent=31 // loop_footer
                %s146 = sadd.s32 1, %s142
              $region38: #{greedy_matching.1} parent=31 // loop_footer_branch
                %141 = sbr.rel target = $region34
              $region39: #{greedy_matching.1} parent=31 // loop_exit
                _
            $region32: #{greedy_matching.1} parent=23 // pred_fallthru
              _
          $region24: #{greedy_matching.1} parent=19 // pred_fallthru
            _
          %193 = vnop
        $region20: #{greedy_matching.1} parent=15 // pred_fallthru
          _
      $region16: #{greedy_matching.1} parent=5 // pred_fallthru
        _
      %p194 = scmp.le.s32.totalorder 1, %s9
      %p195 = scmp.lt.s32.totalorder %s9, 3
      %p196 = pnand %p194, %p195
      %p197 = pneg %p196
      // Predicated region
      $region55: #{greedy_matching.1} parent=5 // pred_check
        _
      $region56: #{greedy_matching.1} parent=5 // pred_check_branch
        %199 = sbr.rel (%p196) target = $region58
      $region57: #{greedy_matching.1} parent=5 // pred_region
        %s200 = ssub.s32 %s9, 1
        %s201 = sand.u32 %s36, 1
        %s202 = sand.u32 %s36, 1
        %s203 = smul.addr %s202, 64
        %s204 = scalar_lea.vmem [#allocation4], %s203
        // Predicated region
        $region59: #{greedy_matching.1} parent=57 // pred_check
          %p205 = pneg %p49
        $region60: #{greedy_matching.1} parent=57 // pred_check_branch
          %207 = sbr.rel (%p205) target = $region62
        $region61: #{greedy_matching.1} parent=57 // pred_region
          _
        $region62: #{greedy_matching.1} parent=57 // pred_fallthru
          _
        %s208 = sand.u32 %s36, 1
        %s209 = sand.u32 %s36, 1
        %s210 = smul.addr %s209, 64
        %s211 = scalar_lea.vmem [#allocation4], %s210
        %p212 = pneg %p49
        %p213 = pneg %p46
        %p214 = pneg %p75
        %p215 = pneg %p72
        %p216 = scmp.lt.s32.totalorder %s18, 1
        %s217 = scalar_select %p216, %s18, 1
        %s218 = smul.addr %s217, 8
        %s219 = scalar_lea.vmem %s1, %s218
        %p220 = pneg %p103
        %p221 = pneg %p100
        %p222 = scmp.lt.s32.totalorder %s18, 1
        %s223 = scalar_select %p222, %s18, 1
        %p224 = scmp.lt.s32.totalorder %s19, 0
        %s225 = scalar_select %p224, %s19, 0
        %s226 = sadd.s32 %s225, %s223
        %s227 = smul.addr %s226, 8
        %s228 = scalar_lea.vmem %s2, %s227
        %s229 = smul.u32 8, %s19
        %p230 = scmp.lt.s32.totalorder %s18, 1
        %s231 = scalar_select %p230, %s18, 1
        %s232 = smul.addr %s231, 8
        %s233 = scalar_lea.vmem %s1, %s232
        %p234 = scmp.lt.s32.totalorder %s18, 1
        %s235 = scalar_select %p234, %s18, 1
        %p236 = scmp.lt.s32.totalorder %s19, 0
        %s237 = scalar_select %p236, %s19, 0
        %s238 = sadd.s32 %s237, %s235
        %s239 = smul.addr %s238, 8
        %s240 = scalar_lea.vmem %s2, %s239
        %p241 = scmp.eq.s32.totalorder %s19, 0
        // Predicated region
        $region63: #{greedy_matching.1} parent=57 // pred_check
          %p242 = pneg %p241
        $region64: #{greedy_matching.1} parent=57 // pred_check_branch
          %244 = sbr.rel (%p242) target = $region66
        $region65: #{greedy_matching.1} parent=57 // pred_region
          %vm245 = vcmask 64512
          %246 = vst.msk [vmem:[#allocation2] sm:$0xff] %vm245, 0.0
          %vm247 = vcmask 7168
          %248 = vst.msk [vmem:[#allocation3] sm:$0xff] %vm247, 0.0
        $region66: #{greedy_matching.1} parent=57 // pred_fallthru
          _
        %v249 = vlaneseq
        %v250 = vand.u32 %v249, 127
        %s251 = smul.u32 %s19, 8
        %s252 = ssub.s32 2, %s251
        %p253 = scmp.gt.s32.totalorder %s252, 0
        %s254 = scalar_select %p253, %s252, 0
        %v255 = vld [vmem:[#allocation2] sm:$0xff]
        %v256 = vld [vmem:[#allocation3] sm:$0xff]
        // While loop
        $region67: #{greedy_matching.1} parent=57 // loop_pre_header
          _
        $region68: #{greedy_matching.1} parent=57 // loop_header
          %s258 = sphi %s254, %s260
          %p259 = scmp.ge.s32.totalorder %s258, 8
          %v263 = vphi %v255, %v299
          %v264 = vphi 0, %v302
          %v265 = vphi %v256, %v303
        $region69: #{greedy_matching.1} parent=57 // loop_header_branch
          %262 = sbr.rel (%p259) target = $region73
        $region70: #{greedy_matching.1} parent=57 // loop_body
          %s266 = smul.u32 %s258, 8
          %s267 = scalar_lea.vmem %s204, %s266 [#allocation4]
          %v268 = vld [vmem:[%s267] sm:$0xff]
          %v269 = vadd.f32 %v268, %v263
          %vm270 = vcmask 64512
          %v271 = vsel %vm270, %v269, -inf
          %272 = vmax.xlane.f32.xlu0 %v271
          %v273 = vpop.xlane.xlu0 %272
          %vm274 = vcmp.gt.f32.partialorder %v273, 0.0
          %vm275 = vcmp.ge.f32.partialorder %v269, %v273
          %v276 = vsel %vm275, %v250, 8
          %v277 = vsel %vm270, %v276, 2147483647
          %v278 = vand.u32 %v277, 65535
          %v279 = vshra.s32 %v277, 16
          %v280 = vcvt.s32.f32 %v278
          %v281 = vcvt.s32.f32 %v279
          %282 = vmin.xlane.f32.xlu0 %v281
          %v283 = vpop.xlane.xlu0 %282
          %vm284 = vcmp.eq.f32.partialorder %v281, %v283
          %v285 = vsel %vm284, %v280, inf
          %286 = vmin.xlane.f32.xlu0 %v285
          %v287 = vpop.xlane.xlu0 %286
          %v288 = vcvt.f32.s32 %v287
          %v289 = vcvt.f32.s32 %v283
          %v290 = vshll.u32 %v289, 16
          %v291 = vadd.s32 %v290, %v288
          %v292 = vadd.s32 %v291, 1
          %v293 = vsel %vm274, %v292, 0
          %v294 = vsel %vm274, %v273, 0.0
          %vm295 = vcmp.eq.s32.totalorder %v250, %v291
          %v296 = vsel %vm274, 1, 0
          %vm297 = vcmp.eq.s32.totalorder %v296, 1
          %vm298 = vmand %vm295, %vm297
          %v299 = vsel %vm298, -1e+30, %v263
          %v300 = vstv %s258
          %vm301 = vcmp.eq.s32.totalorder %v250, %v300
          %v302 = vsel %vm301, %v293, %v264
          %v303 = vadd.f32 %v265, %v294
        $region71: #{greedy_matching.1} parent=57 // loop_footer
          %s260 = sadd.s32 %s258, 1
        $region72: #{greedy_matching.1} parent=57 // loop_footer_branch
          %257 = sbr.rel target = $region68
        $region73: #{greedy_matching.1} parent=57 // loop_exit
          _
        %vm304 = vcmask 64512
        %305 = vst.msk [vmem:[#allocation2] sm:$0xff] %vm304, %v263
        %vm306 = vcmask 7168
        %307 = vst.msk [vmem:[#allocation3] sm:$0xff] %vm306, %v265
        %308 = vst.msk [vmem:[%s240] sm:$0xff] %vm304, %v264
        // Predicated region
        $region74: #{greedy_matching.1} parent=57 // pred_check
          %p309 = pneg %p241
        $region75: #{greedy_matching.1} parent=57 // pred_check_branch
          %311 = sbr.rel (%p309) target = $region77
        $region76: #{greedy_matching.1} parent=57 // pred_region
          %v312 = vsub.f32 0.0, %v265
          %313 = vst.msk [vmem:[%s233] sm:$0xff] %vm306, %v312
        $region77: #{greedy_matching.1} parent=57 // pred_fallthru
          _
        %p314 = scmp.lt.s32.totalorder %s18, 1
        %s315 = scalar_select %p314, %s18, 1
        %s316 = smul.addr %s315, 8
        %s317 = scalar_lea.vmem %s1, %s316
        %p318 = scmp.lt.s32.totalorder %s18, 1
        %s319 = scalar_select %p318, %s18, 1
        %p320 = scmp.lt.s32.totalorder %s19, 0
        %s321 = scalar_select %p320, %s19, 0
        %s322 = sadd.s32 %s321, %s319
        %s323 = smul.addr %s322, 8
        %s324 = scalar_lea.vmem %s2, %s323
        // Predicated region
        $region78: #{greedy_matching.1} parent=57 // pred_check
          %p325 = pneg %p72
        $region79: #{greedy_matching.1} parent=57 // pred_check_branch
          %327 = sbr.rel (%p325) target = $region81
        $region80: #{greedy_matching.1} parent=57 // pred_region
          _
        $region81: #{greedy_matching.1} parent=57 // pred_fallthru
          _
        // Predicated region
        $region82: #{greedy_matching.1} parent=57 // pred_check
          %p328 = pneg %p100
        $region83: #{greedy_matching.1} parent=57 // pred_check_branch
          %330 = sbr.rel (%p328) target = $region85
        $region84: #{greedy_matching.1} parent=57 // pred_region
          _
        $region85: #{greedy_matching.1} parent=57 // pred_fallthru
          _
      $region58: #{greedy_matching.1} parent=5 // pred_fallthru
        _
      %p331 = scmp.le.s32.totalorder 2, %s9
      // Predicated region
      $region86: #{greedy_matching.1} parent=5 // pred_check
        %p332 = pneg %p331
      $region87: #{greedy_matching.1} parent=5 // pred_check_branch
        %334 = sbr.rel (%p332) target = $region89
      $region88: #{greedy_matching.1} parent=5 // pred_region
        %s335 = ssub.s32 %s9, 2
        // Predicated region
        $region90: #{greedy_matching.1} parent=88 // pred_check
          %p336 = pneg %p78
        $region91: #{greedy_matching.1} parent=88 // pred_check_branch
          %338 = sbr.rel (%p336) target = $region93
        $region92: #{greedy_matching.1} parent=88 // pred_region
          %p339 = scmp.lt.s32.totalorder %s20, 1
          %s340 = scalar_select %p339, %s20, 1
          %s341 = smul.addr %s340, 8
          %s342 = scalar_lea.vmem %s1, %s341
        $region93: #{greedy_matching.1} parent=88 // pred_fallthru
          _
        // Predicated region
        $region94: #{greedy_matching.1} parent=88 // pred_check
          %p343 = pneg %p106
        $region95: #{greedy_matching.1} parent=88 // pred_check_branch
          %345 = sbr.rel (%p343) target = $region97
        $region96: #{greedy_matching.1} parent=88 // pred_region
          %p346 = scmp.lt.s32.totalorder %s20, 1
          %s347 = scalar_select %p346, %s20, 1
          %p348 = scmp.lt.s32.totalorder %s21, 0
          %s349 = scalar_select %p348, %s21, 0
          %s350 = sadd.s32 %s349, %s347
          %s351 = smul.addr %s350, 8
          %s352 = scalar_lea.vmem %s2, %s351
        $region97: #{greedy_matching.1} parent=88 // pred_fallthru
          _
      $region89: #{greedy_matching.1} parent=5 // pred_fallthru
        _
    $region6: #{greedy_matching.1} parent=1 // loop_footer
      %s13 = sadd.s32 1, %s9
    $region7: #{greedy_matching.1} parent=1 // loop_footer_branch
      %8 = sbr.rel target = $region3
    $region8: #{greedy_matching.1} parent=1 // loop_exit
      _

</llo_original>
